<compile_context>
chip_gen: v6e
topology: v6e:2x2x1
jax: 0.10.0
libtpu: 0.0.40
codegen_flags: <defaults>
</compile_context>

<pallas_src>
import jax
import jax.numpy as jnp
from jax.experimental import pallas as pl
from jax.experimental.pallas import tpu as pltpu

EPS = 1e-5
NEG_SLOPE = 0.2


def fc_block_kernel(x_ref, w_ref, gamma_ref, beta_ref, o_ref, acc_ref):
    k = pl.program_id(1)

    @pl.when(k == 0)
    def _():
        acc_ref[...] = jnp.zeros_like(acc_ref)

    # Linear (bias folded away): accumulate (B, TK) @ (TK, TN) into f32 scratch.
    acc_ref[...] += jnp.dot(
        x_ref[...], w_ref[...], preferred_element_type=jnp.float32
    )

    @pl.when(k == pl.num_programs(1) - 1)
    def _():
        h = acc_ref[...]
        inv_n = 1.0 / h.shape[0]

        # BatchNorm1d (training mode): per-feature mean / biased variance over batch.
        mean = jnp.sum(h, axis=0, keepdims=True) * inv_n
        centered = h - mean
        var = jnp.sum(centered * centered, axis=0, keepdims=True) * inv_n
        scale = gamma_ref[...] * jax.lax.rsqrt(var + EPS)
        y = centered * scale + beta_ref[...]

        # LeakyReLU(0.2) as a single max (exact for slope in (0, 1)).
        o_ref[...] = jnp.maximum(y, NEG_SLOPE * y).astype(o_ref.dtype)


def _round_up(a, m):
    return ((a + m - 1) // m) * m


def fully_connected_block(x, weight, bias, gamma, beta):
    """x: (B, Cin); weight: (Cin, Cout); bias/gamma/beta: (Cout,).

    `bias` is accepted for API parity with nn.Linear but is not used: a
    per-feature constant added before BatchNorm cancels exactly in (h - mean).
    """
    del bias
    B, Cin = x.shape
    Cout = weight.shape[1]

    # 128-aligned tiles, capped at 512 for VMEM / double-buffer headroom
    # (fits comfortably inside the default scoped-VMEM budget on v5e/v6e/v7x).
    TN = 512 if Cout > 512 else _round_up(Cout, 128)
    TK = 512 if Cin > 512 else _round_up(Cin, 128)
    Cout_p = _round_up(Cout, TN)
    Cin_p = _round_up(Cin, TK)

    # Zero-pad: Cin padding contributes nothing to the matmul; Cout padding gives
    # lane-dense 128-multiple output tiles and is sliced off afterwards.
    x_p = x if Cin_p == Cin else jnp.pad(x, ((0, 0), (0, Cin_p - Cin)))
    w_p = weight
    if Cin_p != Cin or Cout_p != Cout:
        w_p = jnp.pad(weight, ((0, Cin_p - Cin), (0, Cout_p - Cout)))
    gamma_p = gamma if Cout_p == Cout else jnp.pad(gamma, (0, Cout_p - Cout))
    beta_p = beta if Cout_p == Cout else jnp.pad(beta, (0, Cout_p - Cout))

    gamma2 = gamma_p.reshape(1, Cout_p)
    beta2 = beta_p.reshape(1, Cout_p)

    nj = Cout_p // TN  # output-feature tiles (independent -> parallel)
    nk = Cin_p // TK   # reduction tiles (last grid axis -> arbitrary)

    out_p = pl.pallas_call(
        fc_block_kernel,
        out_shape=jax.ShapeDtypeStruct((B, Cout_p), x.dtype),
        grid=(nj, nk),
        in_specs=[
            pl.BlockSpec((B, TK), lambda j, k: (0, k)),      # x
            pl.BlockSpec((TK, TN), lambda j, k: (k, j)),     # weight
            pl.BlockSpec((1, TN), lambda j, k: (0, j)),      # gamma
            pl.BlockSpec((1, TN), lambda j, k: (0, j)),      # beta
        ],
        out_specs=pl.BlockSpec((B, TN), lambda j, k: (0, j)),
        scratch_shapes=[pltpu.VMEM((B, TN), jnp.float32)],
        compiler_params=pltpu.CompilerParams(
            dimension_semantics=("parallel", "arbitrary"),
        ),
    )(x_p, w_p, gamma2, beta2)

    if Cout_p != Cout:
        out_p = out_p[:, :Cout]
    return out_p


def reference(x, weight, bias, gamma, beta):
    h = x @ weight + bias
    mean = h.mean(axis=0, keepdims=True)
    var = ((h - mean) ** 2).mean(axis=0, keepdims=True)  # biased, as in PyTorch BN fwd
    y = (h - mean) / jnp.sqrt(var + EPS) * gamma + beta
    return jnp.where(y > 0, y, NEG_SLOPE * y)


if __name__ == "__main__":
    key = jax.random.PRNGKey(0)
    B, IN_F, OUT_F = 8, 32, 64

    k_x, k_w, k_b = jax.random.split(key, 3)
    x = jax.random.normal(k_x, (B, IN_F), dtype=jnp.float32)

    # Deterministic PyTorch-style init: U(-1/sqrt(in), 1/sqrt(in))
    bound = 1.0 / (IN_F ** 0.5)
    weight = jax.random.uniform(k_w, (IN_F, OUT_F), minval=-bound, maxval=bound,
                                dtype=jnp.float32)
    bias = jax.random.uniform(k_b, (OUT_F,), minval=-bound, maxval=bound,
                              dtype=jnp.float32)
    gamma = jnp.ones((OUT_F,), dtype=jnp.float32)   # BatchNorm1d weight
    beta = jnp.zeros((OUT_F,), dtype=jnp.float32)   # BatchNorm1d bias

    out = fully_connected_block(x, weight, bias, gamma, beta)
    out = jax.block_until_ready(out)

    ref = reference(x, weight, bias, gamma, beta)
    assert out.shape == (B, OUT_F)
    assert jnp.allclose(out, ref, atol=1e-5, rtol=1e-5), (
        f"max err {jnp.max(jnp.abs(out - ref))}")

    print("KERNEL_OK")
</pallas_src>

<mosaic_0001>
module attributes {stable_mosaic.version = 11 : i64} {
  func.func @fc_block_kernel(%arg0: i32, %arg1: i32, %arg2: memref<8x128xf32, #tpu.memory_space<vmem>>, %arg3: memref<128x128xf32, #tpu.memory_space<vmem>>, %arg4: memref<1x128xf32, #tpu.memory_space<vmem>>, %arg5: memref<1x128xf32, #tpu.memory_space<vmem>>, %arg6: memref<8x128xf32, #tpu.memory_space<vmem>>, %arg7: memref<8x128xf32, #tpu.memory_space<vmem>>) attributes {dimension_semantics = [#tpu.dimension_semantics<parallel>, #tpu.dimension_semantics<arbitrary>], iteration_bounds = array<i64: 1, 1>, scalar_prefetch = 0 : i64, scratch_operands = 1 : i64, tpu.core_type = #tpu.core_type<tc>, window_params = [{transform_indices = @transform_0, window_bounds = array<i64: 8, 128>}, {transform_indices = @transform_1, window_bounds = array<i64: 128, 128>}, {transform_indices = @transform_2, window_bounds = array<i64: 1, 128>}, {transform_indices = @transform_3, window_bounds = array<i64: 1, 128>}, {transform_indices = @transform_4, window_bounds = array<i64: 8, 128>}]} {
    %c0_i32 = arith.constant 0 : i32
    %0 = arith.cmpi eq, %arg1, %c0_i32 : i32
    %1 = arith.extui %0 : i1 to i32
    %c0_i32_0 = arith.constant 0 : i32
    %2 = arith.cmpi ne, %1, %c0_i32_0 : i32
    scf.if %2 {
      %cst_10 = arith.constant 0.000000e+00 : f32
      %12 = vector.broadcast %cst_10 : f32 to vector<8x128xf32>
      %c0_11 = arith.constant 0 : index
      %c0_12 = arith.constant 0 : index
      %13 = vector.load %arg7[%c0_11, %c0_12] : memref<8x128xf32, #tpu.memory_space<vmem>>, vector<8x128xf32>
      tpu.vector_store %arg7[%c0_11, %c0_12], %12 {strides = array<i32>} : memref<8x128xf32, #tpu.memory_space<vmem>>, vector<8x128xf32>,
    } else {
    }
    %c0 = arith.constant 0 : index
    %c0_1 = arith.constant 0 : index
    %3 = vector.load %arg7[%c0, %c0_1] : memref<8x128xf32, #tpu.memory_space<vmem>>, vector<8x128xf32>
    %c0_2 = arith.constant 0 : index
    %c0_3 = arith.constant 0 : index
    %4 = vector.load %arg2[%c0_2, %c0_3] : memref<8x128xf32, #tpu.memory_space<vmem>>, vector<8x128xf32>
    %c0_4 = arith.constant 0 : index
    %c0_5 = arith.constant 0 : index
    %5 = vector.load %arg3[%c0_4, %c0_5] : memref<128x128xf32, #tpu.memory_space<vmem>>, vector<128x128xf32>
    %cst = arith.constant dense<0.000000e+00> : vector<8x128xf32>
    %6 = tpu.matmul %4, %5, %cst {dimension_numbers = #tpu.dot_dimension_numbers<[1], [0], [0], [1], [0, 0, 1, 1], [], []>} : vector<8x128xf32>, vector<128x128xf32>, vector<8x128xf32> -> vector<8x128xf32>
    %7 = arith.addf %3, %6 : vector<8x128xf32>
    %c0_6 = arith.constant 0 : index
    %c0_7 = arith.constant 0 : index
    %8 = vector.load %arg7[%c0_6, %c0_7] : memref<8x128xf32, #tpu.memory_space<vmem>>, vector<8x128xf32>
    tpu.vector_store %arg7[%c0_6, %c0_7], %7 {strides = array<i32>} : memref<8x128xf32, #tpu.memory_space<vmem>>, vector<8x128xf32>,
    %c0_i32_8 = arith.constant 0 : i32
    %9 = arith.cmpi eq, %arg1, %c0_i32_8 : i32
    %10 = arith.extui %9 : i1 to i32
    %c0_i32_9 = arith.constant 0 : i32
    %11 = arith.cmpi ne, %10, %c0_i32_9 : i32
    scf.if %11 {
      %c0_10 = arith.constant 0 : index
      %c0_11 = arith.constant 0 : index
      %12 = vector.load %arg7[%c0_10, %c0_11] : memref<8x128xf32, #tpu.memory_space<vmem>>, vector<8x128xf32>
      %cst_12 = arith.constant dense<0.000000e+00> : vector<128xf32>
      %13 = vector.multi_reduction <add>, %12, %cst_12 [0] : vector<8x128xf32> to vector<128xf32>
      %14 = vector.shape_cast %13 : vector<128xf32> to vector<1x128xf32>
      %cst_13 = arith.constant 1.250000e-01 : f32
      %15 = vector.broadcast %cst_13 : f32 to vector<1x128xf32>
      %16 = arith.mulf %14, %15 : vector<1x128xf32>
      %17 = vector.broadcast %16 : vector<1x128xf32> to vector<8x128xf32>
      %18 = arith.subf %12, %17 : vector<8x128xf32>
      %19 = arith.mulf %18, %18 : vector<8x128xf32>
      %cst_14 = arith.constant dense<0.000000e+00> : vector<128xf32>
      %20 = vector.multi_reduction <add>, %19, %cst_14 [0] : vector<8x128xf32> to vector<128xf32>
      %21 = vector.shape_cast %20 : vector<128xf32> to vector<1x128xf32>
      %cst_15 = arith.constant 1.250000e-01 : f32
      %22 = vector.broadcast %cst_15 : f32 to vector<1x128xf32>
      %23 = arith.mulf %21, %22 : vector<1x128xf32>
      %c0_16 = arith.constant 0 : index
      %c0_17 = arith.constant 0 : index
      %24 = vector.load %arg4[%c0_16, %c0_17] : memref<1x128xf32, #tpu.memory_space<vmem>>, vector<1x128xf32>
      %cst_18 = arith.constant 9.99999974E-6 : f32
      %25 = vector.broadcast %cst_18 : f32 to vector<1x128xf32>
      %26 = arith.addf %23, %25 : vector<1x128xf32>
      %27 = math.rsqrt %26 : vector<1x128xf32>
      %28 = arith.mulf %24, %27 : vector<1x128xf32>
      %29 = vector.broadcast %28 : vector<1x128xf32> to vector<8x128xf32>
      %30 = arith.mulf %18, %29 : vector<8x128xf32>
      %c0_19 = arith.constant 0 : index
      %c0_20 = arith.constant 0 : index
      %31 = vector.load %arg5[%c0_19, %c0_20] : memref<1x128xf32, #tpu.memory_space<vmem>>, vector<1x128xf32>
      %32 = vector.broadcast %31 : vector<1x128xf32> to vector<8x128xf32>
      %33 = arith.addf %30, %32 : vector<8x128xf32>
      %cst_21 = arith.constant 2.000000e-01 : f32
      %34 = vector.broadcast %cst_21 : f32 to vector<8x128xf32>
      %35 = arith.mulf %34, %33 : vector<8x128xf32>
      %36 = arith.maximumf %33, %35 : vector<8x128xf32>
      %c0_22 = arith.constant 0 : index
      %c0_23 = arith.constant 0 : index
      %37 = vector.load %arg6[%c0_22, %c0_23] : memref<8x128xf32, #tpu.memory_space<vmem>>, vector<8x128xf32>
      tpu.vector_store %arg6[%c0_22, %c0_23], %36 {strides = array<i32>} : memref<8x128xf32, #tpu.memory_space<vmem>>, vector<8x128xf32>,
    } else {
    }
    return
  }
  func.func @transform_0(%arg0: i32, %arg1: i32) -> (i32, i32) {
    %c0_i32 = arith.constant 0 : i32
    %c0_i32_0 = arith.constant 0 : i32
    return %c0_i32, %arg1 : i32, i32
  }
  func.func @transform_1(%arg0: i32, %arg1: i32) -> (i32, i32) {
    %c0_i32 = arith.constant 0 : i32
    return %arg1, %arg0 : i32, i32
  }
  func.func @transform_2(%arg0: i32, %arg1: i32) -> (i32, i32) {
    %c0_i32 = arith.constant 0 : i32
    %c0_i32_0 = arith.constant 0 : i32
    return %c0_i32, %arg0 : i32, i32
  }
  func.func @transform_3(%arg0: i32, %arg1: i32) -> (i32, i32) {
    %c0_i32 = arith.constant 0 : i32
    %c0_i32_0 = arith.constant 0 : i32
    return %c0_i32, %arg0 : i32, i32
  }
  func.func @transform_4(%arg0: i32, %arg1: i32) -> (i32, i32) {
    %c0_i32 = arith.constant 0 : i32
    %c0_i32_0 = arith.constant 0 : i32
    return %c0_i32, %arg0 : i32, i32
  }
}

</mosaic_0001>

<llo_original>
// kernel: tpu_custom_call.1
$region0: #{tpu_custom_call.1}
  #allocation0 [shape = 'u32[]', space=smem, size = 0x4, offset = 0x4, fixed_abs, tag = 'smem constant byte address 0x4 - core index']
  #allocation1 [shape = 'u32[144,128]{1,0:T(1,128)}', space=vmem, size = 0x12000, scoped, tag = 'internal scratch']
  #allocation2 [shape = 'f32[8,128]{1,0:T(8,128)}', space=vmem, size = 0x1000, scoped, tag = 'scratch operand']
  %s0 = inlined_call_operand.hbm [shape: f32[8,128], index: 0, kind: input, shape index: {}]
  %s1 = inlined_call_operand.hbm [shape: f32[128,128], index: 1, kind: input, shape index: {}]
  %s2 = inlined_call_operand.vmem [shape: f32[1,128], index: 2, kind: input, shape index: {}]
  %s3 = inlined_call_operand.vmem [shape: f32[1,128], index: 3, kind: input, shape index: {}]
  %s4 = inlined_call_operand.hbm [shape: f32[8,128], index: 4, kind: output, shape index: {}]
  %s5 = sld [smem:[#allocation0]]
  $region42: #{tpu_custom_call.1} parent=0
    _
  %s7 = ssub.s32 1, %s5
  %s8 = scalar_select 0, %s7, %s5
  $region1: #{tpu_custom_call.1} parent=0
    #allocation3 [shape = 'u8[4096]{0}', space=vmem, size = 0x1000, scoped, tag = 'input window, operand 0, single buffered']
    #allocation4 [shape = 's32[1]{0}', space=sflag, size = 0x4, scoped, tag = 'scoped memory for tpu_custom_call.1']
    #allocation5 [shape = 's32[1]{0}', space=sflag, size = 0x4, scoped, tag = 'scoped memory for tpu_custom_call.1']
    #allocation6 [shape = 'u8[65536]{0}', space=vmem, size = 0x10000, scoped, tag = 'input window, operand 1, single buffered']
    #allocation7 [shape = 's32[1]{0}', space=sflag, size = 0x4, scoped, tag = 'scoped memory for tpu_custom_call.1']
    #allocation8 [shape = 'u8[4096]{0}', space=vmem, size = 0x1000, scoped, tag = 'output window, operand 0, single buffered']
    %9 = vsyncpa [#allocation4], 0
    %10 = vsyncpa [#allocation7], 0
    %11 = vsyncpa [#allocation5], 0
    // Predicated region
    $region2: #{tpu_custom_call.1} parent=1 // pred_check
      _
    $region3: #{tpu_custom_call.1} parent=1 // pred_check_branch
      %13 = sbr.rel (0) target = $region5
    $region4: #{tpu_custom_call.1} parent=1 // pred_region
      %s15 = ssub.s32 128, 128
      %16 = vsyncadd [#allocation4], %s15
      %s18 = sshll.u32 [#allocation3], 4
      %s19 = int_to_ptr.vmem [resolvable:$true] %s18
      %21 = dma.hbm_to_vmem [thread:$0]  %s0, 128, %s19, [#allocation4]
    $region5: #{tpu_custom_call.1} parent=1 // pred_fallthru
      _
    // Predicated region
    $region6: #{tpu_custom_call.1} parent=1 // pred_check
      _
    $region7: #{tpu_custom_call.1} parent=1 // pred_check_branch
      %23 = sbr.rel (0) target = $region9
    $region8: #{tpu_custom_call.1} parent=1 // pred_region
      %s25 = ssub.s32 2048, 2048
      %26 = vsyncadd [#allocation7], %s25
      %s27 = sshll.u32 [#allocation6], 4
      %s28 = int_to_ptr.vmem [resolvable:$true] %s27
      %33 = dma.hbm_to_vmem [thread:$0]  %s1, 2048, %s28, [#allocation7], 128, 128, 8
    $region9: #{tpu_custom_call.1} parent=1 // pred_fallthru
      _
    // Predicated region
    $region10: #{tpu_custom_call.1} parent=1 // pred_check
      _
    $region11: #{tpu_custom_call.1} parent=1 // pred_check_branch
      %35 = sbr.rel (0) target = $region13
    $region12: #{tpu_custom_call.1} parent=1 // pred_region
      _
    $region13: #{tpu_custom_call.1} parent=1 // pred_fallthru
      _
    // Predicated region
    $region14: #{tpu_custom_call.1} parent=1 // pred_check
      _
    $region15: #{tpu_custom_call.1} parent=1 // pred_check_branch
      %37 = sbr.rel (0) target = $region17
    $region16: #{tpu_custom_call.1} parent=1 // pred_region
      _
    $region17: #{tpu_custom_call.1} parent=1 // pred_fallthru
      _
    // Predicated region
    $region18: #{tpu_custom_call.1} parent=1 // pred_check
      _
    $region19: #{tpu_custom_call.1} parent=1 // pred_check_branch
      %39 = sbr.rel (0) target = $region21
    $region20: #{tpu_custom_call.1} parent=1 // pred_region
      %40 = dma.done [#allocation4], 128
    $region21: #{tpu_custom_call.1} parent=1 // pred_fallthru
      _
    // Predicated region
    $region22: #{tpu_custom_call.1} parent=1 // pred_check
      _
    $region23: #{tpu_custom_call.1} parent=1 // pred_check_branch
      %42 = sbr.rel (0) target = $region25
    $region24: #{tpu_custom_call.1} parent=1 // pred_region
      %43 = dma.done [#allocation7], 2048
    $region25: #{tpu_custom_call.1} parent=1 // pred_fallthru
      _
    %p44 = scmp.eq.s32.totalorder 0, 0
    // Predicated region
    $region26: #{tpu_custom_call.1} parent=1 // pred_check
      %p45 = pneg %p44
    $region27: #{tpu_custom_call.1} parent=1 // pred_check_branch
      %47 = sbr.rel (%p45) target = $region29
    $region28: #{tpu_custom_call.1} parent=1 // pred_region
      %48 = vst [vmem:[#allocation2] sm:$0xff] 0.0
    $region29: #{tpu_custom_call.1} parent=1 // pred_fallthru
      _
    %v49 = vld [vmem:[#allocation2] sm:$0xff]
    %v50 = vld [vmem:[#allocation3] sm:$0xff]
    %v51 = vld [vmem:[#allocation6] sm:$0xff]
    %v52 = vld [vmem:[#allocation6 + $0x8] sm:$0xff]
    %v53 = vld [vmem:[#allocation6 + $0x10] sm:$0xff]
    %v54 = vld [vmem:[#allocation6 + $0x18] sm:$0xff]
    %v55 = vld [vmem:[#allocation6 + $0x20] sm:$0xff]
    %v56 = vld [vmem:[#allocation6 + $0x28] sm:$0xff]
    %v57 = vld [vmem:[#allocation6 + $0x30] sm:$0xff]
    %v58 = vld [vmem:[#allocation6 + $0x38] sm:$0xff]
    %v59 = vld [vmem:[#allocation6 + $0x40] sm:$0xff]
    %v60 = vld [vmem:[#allocation6 + $0x48] sm:$0xff]
    %v61 = vld [vmem:[#allocation6 + $0x50] sm:$0xff]
    %v62 = vld [vmem:[#allocation6 + $0x58] sm:$0xff]
    %v63 = vld [vmem:[#allocation6 + $0x60] sm:$0xff]
    %v64 = vld [vmem:[#allocation6 + $0x68] sm:$0xff]
    %v65 = vld [vmem:[#allocation6 + $0x70] sm:$0xff]
    %v66 = vld [vmem:[#allocation6 + $0x78] sm:$0xff]
    %67 = vmatprep.subr.mxu0 0.0
    %68 = vmatpush1.msra.mxu0 %v66
    %69 = vmatprep.subr.mxu0 0.0
    %70 = vmatpush1.msra.mxu0 %v65
    %71 = vmatprep.subr.mxu0 0.0
    %72 = vmatpush1.msra.mxu0 %v64
    %73 = vmatprep.subr.mxu0 0.0
    %74 = vmatpush1.msra.mxu0 %v63
    %75 = vmatprep.subr.mxu0 0.0
    %76 = vmatpush1.msra.mxu0 %v62
    %77 = vmatprep.subr.mxu0 0.0
    %78 = vmatpush1.msra.mxu0 %v61
    %79 = vmatprep.subr.mxu0 0.0
    %80 = vmatpush1.msra.mxu0 %v60
    %81 = vmatprep.subr.mxu0 0.0
    %82 = vmatpush1.msra.mxu0 %v59
    %83 = vmatprep.subr.mxu0 0.0
    %84 = vmatpush1.msra.mxu0 %v58
    %85 = vmatprep.subr.mxu0 0.0
    %86 = vmatpush1.msra.mxu0 %v57
    %87 = vmatprep.subr.mxu0 0.0
    %88 = vmatpush1.msra.mxu0 %v56
    %89 = vmatprep.subr.mxu0 0.0
    %90 = vmatpush1.msra.mxu0 %v55
    %91 = vmatprep.subr.mxu0 0.0
    %92 = vmatpush1.msra.mxu0 %v54
    %93 = vmatprep.subr.mxu0 0.0
    %94 = vmatpush1.msra.mxu0 %v53
    %95 = vmatprep.subr.mxu0 0.0
    %96 = vmatpush1.msra.mxu0 %v52
    %97 = vmatprep.subr.mxu0 0.0
    %98 = vmatpush1.msra.mxu0 %v51
    %99 = vmatprep.subr.mxu0 0.0
    %100 = vmatpush2.msra.mxu0 0.0
    %101 = vmatprep.subr.mxu0 0.0
    %102 = vmatpush2.msra.mxu0 0.0
    %103 = vmatprep.subr.mxu0 0.0
    %104 = vmatpush2.msra.mxu0 0.0
    %105 = vmatprep.subr.mxu0 0.0
    %106 = vmatpush2.msra.mxu0 0.0
    %107 = vmatprep.subr.mxu0 0.0
    %108 = vmatpush2.msra.mxu0 0.0
    %109 = vmatprep.subr.mxu0 0.0
    %110 = vmatpush2.msra.mxu0 0.0
    %111 = vmatprep.subr.mxu0 0.0
    %112 = vmatpush2.msra.mxu0 0.0
    %113 = vmatprep.subr.mxu0 0.0
    %114 = vmatpush2.msra.mxu0 0.0
    %115 = vmatprep.subr.mxu0 0.0
    %116 = vmatpush2.msra.mxu0 0.0
    %117 = vmatprep.subr.mxu0 0.0
    %118 = vmatpush2.msra.mxu0 0.0
    %119 = vmatprep.subr.mxu0 0.0
    %120 = vmatpush2.msra.mxu0 0.0
    %121 = vmatprep.subr.mxu0 0.0
    %122 = vmatpush2.msra.mxu0 0.0
    %123 = vmatprep.subr.mxu0 0.0
    %124 = vmatpush2.msra.mxu0 0.0
    %125 = vmatprep.subr.mxu0 0.0
    %126 = vmatpush2.msra.mxu0 0.0
    %127 = vmatprep.subr.mxu0 0.0
    %128 = vmatpush2.msra.mxu0 0.0
    %129 = vmatprep.subr.mxu0 0.0
    %130 = vmatpush2.msra.mxu0 0.0
    %131 = vmatprep.mubr.f32.mxu0 0.0
    %132 = vmatmul.mubr.f32.gmra.mxu0 %v50
    %v133 = vpop.f32.mrf.mxu0
    %v134 = vadd.f32 0.0, %v133
    %v135 = vpop.f32.mrf.mxu0
    %136 = vdwg.mxu0
    %v137 = vadd.f32 %v49, %v134
    %138 = vst [vmem:[#allocation2] sm:$0xff] %v137
    // Predicated region
    $region30: #{tpu_custom_call.1} parent=1 // pred_check
      %p139 = pneg %p44
    $region31: #{tpu_custom_call.1} parent=1 // pred_check_branch
      %141 = sbr.rel (%p139) target = $region33
    $region32: #{tpu_custom_call.1} parent=1 // pred_region
      %v142 = vld [vmem:[#allocation2] sm:$0xff]
      %v143 = vrot.slane %v142, 4
      %v144 = vadd.f32 %v142, %v143
      %v145 = vrot.slane %v144, 2
      %v146 = vadd.f32 %v144, %v145
      %v147 = vrot.slane %v146, 1
      %v148 = vadd.f32 %v146, %v147
      %v149 = vmul.f32 %v148, 0.125
      %v150 = vsub.f32 %v142, %v149
      %v151 = vmul.f32 %v150, %v150
      %v152 = vrot.slane %v151, 4
      %v153 = vadd.f32 %v151, %v152
      %v154 = vrot.slane %v153, 2
      %v155 = vadd.f32 %v153, %v154
      %v156 = vrot.slane %v155, 1
      %v157 = vadd.f32 %v155, %v156
      %v158 = vmul.f32 %v157, 0.125
      %v159 = vld [vmem:[%s2] sm:$0x1]
      %v160 = vadd.f32 %v158, 1e-05
      %v161 = vrsqrt.pop %v160
      %v162 = vmul.f32 %v159, %v161
      %v164 = vlaneseq
      %v165 = vshrl.u32 %v164, 7
      %v166 = vsub.s32 0, %v165
      %v167 = vrot.slane %v162, %v166
      %v169 = vmul.f32 %v150, %v167
      %v170 = vld [vmem:[%s3] sm:$0x1]
      %v172 = vlaneseq
      %v173 = vshrl.u32 %v172, 7
      %v174 = vsub.s32 0, %v173
      %v175 = vrot.slane %v170, %v174
      %v177 = vadd.f32 %v169, %v175
      %v178 = vmul.f32 %v177, 0.2
      %v179 = vmax.f32 %v177, %v178
      %180 = vst [vmem:[#allocation8] sm:$0xff] %v179
    $region33: #{tpu_custom_call.1} parent=1 // pred_fallthru
      _
    // Predicated region
    $region34: #{tpu_custom_call.1} parent=1 // pred_check
      _
    $region35: #{tpu_custom_call.1} parent=1 // pred_check_branch
      %182 = sbr.rel (0) target = $region37
    $region36: #{tpu_custom_call.1} parent=1 // pred_region
      %s184 = ssub.s32 128, 128
      %185 = vsyncadd [#allocation5], %s184
      %s187 = sshll.u32 [#allocation8], 4
      %s188 = int_to_ptr.vmem [resolvable:$true] %s187
      %190 = dma.vmem_to_hbm [thread:$0]  %s188, 128, %s4, [#allocation5]
    $region37: #{tpu_custom_call.1} parent=1 // pred_fallthru
      _
    // Predicated region
    $region38: #{tpu_custom_call.1} parent=1 // pred_check
      _
    $region39: #{tpu_custom_call.1} parent=1 // pred_check_branch
      %192 = sbr.rel (0) target = $region41
    $region40: #{tpu_custom_call.1} parent=1 // pred_region
      %193 = dma.done [#allocation5], 128
    $region41: #{tpu_custom_call.1} parent=1 // pred_fallthru
      _
    %194 = vsyncpa [#allocation4], 1
    %195 = vsyncpa [#allocation7], 1
    %196 = vsyncpa [#allocation5], 1

</llo_original>
